<compile_context>
chip_gen: v7x
topology: tpu7x:2x2x1
jax: 0.10.0
libtpu: 0.0.40
codegen_flags: <defaults>
</compile_context>

<pallas_src>
import math
from functools import partial

import jax
import jax.numpy as jnp
from jax.experimental import pallas as pl
from jax.experimental.pallas import tpu as pltpu


def _rmsnorm_kernel(x_ref, w_ref, o_ref, *, eps, inv_sqrt_d):
    # x_ref: (tm, d_model) tile; w_ref: (1, d_model) resident; o_ref: (tm, d_model).
    # The f32 upcast feeds the squared-sum and the output expression directly; only the
    # (tm, 1) per-row statistics need to persist across the lane reduction.
    xf = x_ref[...].astype(jnp.float32)
    sumsq = jnp.sum(xf * xf, axis=-1, keepdims=True)
    rms = jnp.sqrt(sumsq) * inv_sqrt_d              # matches torch: norm(dim=-1)/sqrt(d)
    inv = pl.reciprocal(rms + eps, approx=False)    # exact: matches reference to ~1e-7
    w = w_ref[...].astype(jnp.float32)
    o_ref[...] = (xf * inv * w).astype(o_ref.dtype)


def _vmem_budget_bytes():
    """Generation-aware (tile budget, scoped-VMEM limit), both in bytes."""
    vmem_cap = None
    try:
        vmem_cap = getattr(pltpu.get_tpu_info(), "vmem_capacity_bytes", None)
    except Exception:
        vmem_cap = None
    if vmem_cap is not None and vmem_cap >= 96 * 1024 * 1024:
        # v5e / v6e: 128 MiB physical VMEM -> allow large tiles.
        return 48 * 1024 * 1024, 64 * 1024 * 1024
    if vmem_cap is not None:
        # v7x: 64 MiB per TensorCore -> stay well under it.
        return 24 * 1024 * 1024, 48 * 1024 * 1024
    # Unknown -> conservative defaults that are safe on every generation.
    return 20 * 1024 * 1024, 32 * 1024 * 1024


def _choose_row_tile(rows, d_model, itemsize, vmem_budget):
    """Row tile that is (a) a multiple of the dtype's sublane pack (unmasked sublane
    loads/stores), (b) large enough that each grid step moves >= ~2 MiB of in+out HBM
    traffic (amortizes the ~0.35us per-step overhead), (c) small enough that the
    double-buffered in+out tiles fit the VMEM budget, and (d) leaves >= 2 grid steps on
    non-trivial inputs so the parallel axis shards across v7x's two TensorCores."""
    pack = {4: 8, 2: 16, 1: 32}.get(itemsize, 8)
    if rows <= pack:
        return rows  # full-array block (block dim == array dim is always legal)

    row_bytes = d_model * itemsize
    # Per-row VMEM: 2x double-buffered input + 2x double-buffered output tiles, plus a
    # little f32 working-set slack (only (tm, 1) partials persist across the reduction).
    vmem_per_row = 4 * row_bytes + d_model * 4
    tm_cap = max(pack, vmem_budget // max(1, vmem_per_row))

    # Traffic floor: >= ~2 MiB of (in + out) HBM bytes per grid step.
    tm_floor = pl.cdiv(2 * 1024 * 1024, max(1, 2 * row_bytes))

    tm = min(tm_cap, max(tm_floor, pack))
    tm = min(tm, max(pack, (rows // pack) * pack))
    tm = max(pack, (tm // pack) * pack)

    # Megacore: if a large input would collapse to one grid step, split it in two.
    total_hbm_bytes = 2 * rows * row_bytes
    if pl.cdiv(rows, tm) < 2 and rows >= 2 * pack and total_hbm_bytes >= (4 << 20):
        tm = max(pack, pl.cdiv(pl.cdiv(rows, 2), pack) * pack)
    return tm


def rmsnorm(x, weight, eps=1e-8):
    """x: (..., d_model); weight: (d_model,). Returns same shape/dtype as x."""
    orig_shape = x.shape
    d_model = orig_shape[-1]
    rows = 1
    for s in orig_shape[:-1]:
        rows *= s
    x2 = x.reshape(rows, d_model)
    w2 = weight.reshape(1, d_model)

    itemsize = jnp.dtype(x.dtype).itemsize
    vmem_budget, vmem_limit = _vmem_budget_bytes()
    tm = _choose_row_tile(rows, d_model, itemsize, vmem_budget)
    grid = (pl.cdiv(rows, tm),)

    # NOTE: peak lane utilization assumes d_model % 128 == 0; for small d_model (the
    # demo's 32) the block still spans the full last dim so it lowers cleanly, just with
    # partially-masked lane stores.
    out = pl.pallas_call(
        partial(_rmsnorm_kernel, eps=eps, inv_sqrt_d=1.0 / math.sqrt(d_model)),
        out_shape=jax.ShapeDtypeStruct((rows, d_model), x.dtype),
        grid_spec=pltpu.PrefetchScalarGridSpec(
            num_scalar_prefetch=0,
            grid=grid,
            in_specs=[
                pl.BlockSpec((tm, d_model), lambda i: (i, 0)),
                # Weight block is constant across the grid (stays resident) and tiny.
                pl.BlockSpec((1, d_model), lambda i: (0, 0)),
            ],
            out_specs=pl.BlockSpec((tm, d_model), lambda i: (i, 0)),
        ),
        compiler_params=pltpu.CompilerParams(
            dimension_semantics=("parallel",),
            vmem_limit_bytes=vmem_limit,
        ),
    )(x2, w2)

    return out.reshape(orig_shape)


if __name__ == "__main__":
    key = jax.random.PRNGKey(0)
    batch, seq, d_model = 2, 8, 32
    eps = 1e-8

    x = jax.random.normal(key, (batch, seq, d_model), dtype=jnp.float32)
    # Deterministic parameter init: nn.Parameter(torch.ones(d_model))
    weight = jnp.ones((d_model,), dtype=jnp.float32)

    out = jax.block_until_ready(rmsnorm(x, weight, eps=eps))

    def ref_fn(xx, ww):
        rms = jnp.linalg.norm(xx, axis=-1, keepdims=True) / math.sqrt(xx.shape[-1])
        return ww * (xx / (rms + eps))

    ref = ref_fn(x, weight)
    assert out.shape == x.shape and out.dtype == x.dtype
    assert jnp.allclose(out, ref, atol=1e-5, rtol=1e-5)

    # Awkward (non-multiple-of-8) row count: exercises the masked boundary block
    # (no host-side pad / slice copies any more).
    x_odd = jax.random.normal(jax.random.PRNGKey(1), (3, 5, d_model), dtype=jnp.float32)
    out_odd = jax.block_until_ready(rmsnorm(x_odd, weight, eps=eps))
    assert jnp.allclose(out_odd, ref_fn(x_odd, weight), atol=1e-5, rtol=1e-5)

    print("KERNEL_OK")
</pallas_src>

<mosaic_0001>
module attributes {stable_mosaic.version = 11 : i64} {
  func.func @_rmsnorm_kernel(%arg0: i32, %arg1: memref<16x32xf32, #tpu.memory_space<vmem>>, %arg2: memref<1x32xf32, #tpu.memory_space<vmem>>, %arg3: memref<16x32xf32, #tpu.memory_space<vmem>>) attributes {dimension_semantics = [#tpu.dimension_semantics<parallel>], iteration_bounds = array<i64: 1>, scalar_prefetch = 0 : i64, scratch_operands = 0 : i64, tpu.core_type = #tpu.core_type<tc>, window_params = [{transform_indices = @transform_0, window_bounds = array<i64: 16, 32>}, {pipeline_mode = #tpu.pipeline_mode<synchronous>, transform_indices = @transform_1, window_bounds = array<i64: 1, 32>}, {transform_indices = @transform_2, window_bounds = array<i64: 16, 32>}]} {
    %c0 = arith.constant 0 : index
    %c0_0 = arith.constant 0 : index
    %0 = vector.load %arg1[%c0, %c0_0] : memref<16x32xf32, #tpu.memory_space<vmem>>, vector<16x32xf32>
    %1 = arith.mulf %0, %0 : vector<16x32xf32>
    %cst = arith.constant dense<0.000000e+00> : vector<16xf32>
    %2 = vector.multi_reduction <add>, %1, %cst [1] : vector<16x32xf32> to vector<16xf32>
    %3 = vector.shape_cast %2 : vector<16xf32> to vector<16x1xf32>
    %4 = math.sqrt %3 : vector<16x1xf32>
    %cst_1 = arith.constant 0.176776692 : f32
    %5 = vector.broadcast %cst_1 : f32 to vector<16x1xf32>
    %6 = arith.mulf %4, %5 : vector<16x1xf32>
    %cst_2 = arith.constant 9.99999993E-9 : f32
    %7 = vector.broadcast %cst_2 : f32 to vector<16x1xf32>
    %8 = arith.addf %6, %7 : vector<16x1xf32>
    %9 = tpu.reciprocal %8 : vector<16x1xf32> -> vector<16x1xf32>
    %c0_3 = arith.constant 0 : index
    %c0_4 = arith.constant 0 : index
    %10 = vector.load %arg2[%c0_3, %c0_4] : memref<1x32xf32, #tpu.memory_space<vmem>>, vector<1x32xf32>
    %11 = vector.broadcast %9 : vector<16x1xf32> to vector<16x32xf32>
    %12 = arith.mulf %0, %11 : vector<16x32xf32>
    %13 = vector.broadcast %10 : vector<1x32xf32> to vector<16x32xf32>
    %14 = arith.mulf %12, %13 : vector<16x32xf32>
    %c0_5 = arith.constant 0 : index
    %c0_6 = arith.constant 0 : index
    %15 = vector.load %arg3[%c0_5, %c0_6] : memref<16x32xf32, #tpu.memory_space<vmem>>, vector<16x32xf32>
    tpu.vector_store %arg3[%c0_5, %c0_6], %14 {strides = array<i32>} : memref<16x32xf32, #tpu.memory_space<vmem>>, vector<16x32xf32>,
    return
  }
  func.func @transform_0(%arg0: i32) -> (i32, i32) {
    %c0_i32 = arith.constant 0 : i32
    %c0_i32_0 = arith.constant 0 : i32
    return %arg0, %c0_i32 : i32, i32
  }
  func.func @transform_1(%arg0: i32) -> (i32, i32) {
    %c0_i32 = arith.constant 0 : i32
    %c0_i32_0 = arith.constant 0 : i32
    %c0_i32_1 = arith.constant 0 : i32
    return %c0_i32, %c0_i32_0 : i32, i32
  }
  func.func @transform_2(%arg0: i32) -> (i32, i32) {
    %c0_i32 = arith.constant 0 : i32
    %c0_i32_0 = arith.constant 0 : i32
    return %arg0, %c0_i32 : i32, i32
  }
}

</mosaic_0001>

<llo_original>
// kernel: tpu_custom_call.1
$region0: #{tpu_custom_call.1}
  #allocation0 [shape = 'u32[]', space=smem, size = 0x4, offset = 0x4, fixed_abs, tag = 'smem constant byte address 0x4 - core index']
  #allocation1 [shape = 'u32[144,128]{1,0:T(1,128)}', space=vmem, size = 0x12000, scoped, tag = 'internal scratch']
  %s0 = inlined_call_operand.hbm [shape: f32[16,32], index: 0, kind: input, shape index: {}]
  %s1 = inlined_call_operand.vmem [shape: f32[1,32], index: 1, kind: input, shape index: {}]
  %s2 = inlined_call_operand.hbm [shape: f32[16,32], index: 2, kind: output, shape index: {}]
  %s3 = sld [smem:[#allocation0]]
  $region22: #{tpu_custom_call.1} parent=0
    _
  %s5 = ssub.s32 1, %s3
  %s6 = scalar_select 0, %s5, %s3
  $region1: #{tpu_custom_call.1} parent=0
    #allocation2 [shape = 'u8[8192]{0}', space=vmem, size = 0x2000, scoped, tag = 'input window, operand 0, single buffered']
    #allocation3 [shape = 's32[1]{0}', space=sflag, size = 0x4, scoped, tag = 'scoped memory for tpu_custom_call.1']
    #allocation4 [shape = 's32[1]{0}', space=sflag, size = 0x4, scoped, tag = 'scoped memory for tpu_custom_call.1']
    #allocation5 [shape = 'u8[8192]{0}', space=vmem, size = 0x2000, scoped, tag = 'output window, operand 0, single buffered']
    %7 = vsyncpa [#allocation3], 0
    %8 = vsyncpa [#allocation4], 0
    // Predicated region
    $region2: #{tpu_custom_call.1} parent=1 // pred_check
      _
    $region3: #{tpu_custom_call.1} parent=1 // pred_check_branch
      %10 = sbr.rel (0) target = $region5
    $region4: #{tpu_custom_call.1} parent=1 // pred_region
      %s12 = ssub.s32 256, 256
      %13 = vsyncadd [#allocation3], %s12
      %s14 = sshll.u32 [#allocation2], 4
      %s15 = int_to_ptr.vmem [resolvable:$true] %s14
      %20 = dma.hbm_to_vmem [thread:$0]  %s0, 256, %s15, [#allocation3], 128, 128, 8
    $region5: #{tpu_custom_call.1} parent=1 // pred_fallthru
      _
    // Predicated region
    $region6: #{tpu_custom_call.1} parent=1 // pred_check
      _
    $region7: #{tpu_custom_call.1} parent=1 // pred_check_branch
      %22 = sbr.rel (0) target = $region9
    $region8: #{tpu_custom_call.1} parent=1 // pred_region
      _
    $region9: #{tpu_custom_call.1} parent=1 // pred_fallthru
      _
    // Predicated region
    $region10: #{tpu_custom_call.1} parent=1 // pred_check
      _
    $region11: #{tpu_custom_call.1} parent=1 // pred_check_branch
      %24 = sbr.rel (0) target = $region13
    $region12: #{tpu_custom_call.1} parent=1 // pred_region
      %25 = dma.done [#allocation3], 256
    $region13: #{tpu_custom_call.1} parent=1 // pred_fallthru
      _
    %v26 = vld [vmem:[#allocation2] sm:$0xff]
    %v27 = vld [vmem:[#allocation2 + $0x8] sm:$0xff]
    %v28 = vmul.f32 %v26, %v26
    %v29 = vmul.f32 %v27, %v27
    %vm30 = vcmask 261120
    %v31 = vsel %vm30, %v28, 0.0
    %32 = vadd.xlane.f32.xlu0 %v31
    %v33 = vpop.xlane.xlu0 %32
    %v34 = vsel %vm30, %v29, 0.0
    %35 = vadd.xlane.f32.xlu0 %v34
    %v36 = vpop.xlane.xlu0 %35
    %v37 = vrsqrt.pop %v33
    %v38 = vmul.f32 %v33, %v37
    %vm39 = vcmp.eq.f32.partialorder %v33, inf
    %v40 = vsel %vm39, %v33, %v38
    %vm41 = vcmp.eq.f32.partialorder %v33, 0.0
    %v42 = vand.u32 %v33, 2147483648
    %v43 = vsel %vm41, %v42, %v40
    %v44 = vrsqrt.pop %v36
    %v45 = vmul.f32 %v36, %v44
    %vm46 = vcmp.eq.f32.partialorder %v36, inf
    %v47 = vsel %vm46, %v36, %v45
    %vm48 = vcmp.eq.f32.partialorder %v36, 0.0
    %v49 = vand.u32 %v36, 2147483648
    %v50 = vsel %vm48, %v49, %v47
    %v51 = vmul.f32 %v43, 0.17677669
    %v52 = vmul.f32 %v50, 0.17677669
    %v53 = vadd.f32 %v51, 1e-08
    %v54 = vadd.f32 %v52, 1e-08
    %v55 = vrcp.pop %v53
    %v56 = vrcp.pop %v54
    %v57 = vld [vmem:[%s1] sm:$0x1]
    %v58 = vmul.f32 %v26, %v55
    %v59 = vmul.f32 %v27, %v56
    %v61 = vlaneseq
    %v62 = vshrl.u32 %v61, 7
    %v63 = vsub.s32 0, %v62
    %v64 = vrot.slane %v57, %v63
    %v66 = vmul.f32 %v58, %v64
    %v67 = vmul.f32 %v59, %v64
    %68 = vst.msk [vmem:[#allocation5] sm:$0xff] %vm30, %v66
    %69 = vst.msk [vmem:[#allocation5 + $0x8] sm:$0xff] %vm30, %v67
    // Predicated region
    $region14: #{tpu_custom_call.1} parent=1 // pred_check
      _
    $region15: #{tpu_custom_call.1} parent=1 // pred_check_branch
      %71 = sbr.rel (0) target = $region17
    $region16: #{tpu_custom_call.1} parent=1 // pred_region
      %s73 = ssub.s32 256, 256
      %74 = vsyncadd [#allocation4], %s73
      %s75 = sshll.u32 [#allocation5], 4
      %s76 = int_to_ptr.vmem [resolvable:$true] %s75
      %81 = dma.vmem_to_hbm [thread:$0]  %s76, 256, %s2, [#allocation4], 128, 128, 8
    $region17: #{tpu_custom_call.1} parent=1 // pred_fallthru
      _
    // Predicated region
    $region18: #{tpu_custom_call.1} parent=1 // pred_check
      _
    $region19: #{tpu_custom_call.1} parent=1 // pred_check_branch
      %83 = sbr.rel (0) target = $region21
    $region20: #{tpu_custom_call.1} parent=1 // pred_region
      %84 = dma.done [#allocation4], 256
    $region21: #{tpu_custom_call.1} parent=1 // pred_fallthru
      _
    %85 = vsyncpa [#allocation3], 1
    %86 = vsyncpa [#allocation4], 1

</llo_original>
